<compile_context>
chip_gen: v7x
topology: tpu7x:2x2x1
jax: 0.10.0
libtpu: 0.0.40
codegen_flags: <defaults>
</compile_context>

<pallas_src>
import jax
import jax.numpy as jnp
from jax.experimental import pallas as pl
from jax.experimental.pallas import tpu as pltpu


def _spatial_attn_kernel(x_ref, o_ref, acc_ref):
    # x_ref:   [Bt, Ct, S]   one channel-tile of Bt batch elements
    # o_ref:   [Bt, 1,  S]   resident across the channel-tile grid axis
    # acc_ref: [Bt, 1,  S]   f32 running channel sum (VMEM scratch)
    k = pl.program_id(1)

    @pl.when(k == 0)
    def _init():
        acc_ref[...] = jnp.zeros_like(acc_ref)

    # Channel partial sum; the 1/C of the PyTorch mean cancels in the final
    # normalization, so it is never applied.
    x = x_ref[...].astype(jnp.float32)                     # [Bt, Ct, S]
    acc_ref[...] += jnp.sum(x, axis=1, keepdims=True)      # [Bt, 1, S]

    @pl.when(k == pl.num_programs(1) - 1)
    def _finalize():
        s = acc_ref[...]                                    # [Bt, 1, S]
        denom = jnp.sum(s, axis=2, keepdims=True)           # [Bt, 1, 1]
        # EUP reciprocal + VPU broadcast multiply instead of per-lane divide.
        o_ref[...] = (s * pl.reciprocal(denom, approx=False)).astype(o_ref.dtype)


def _largest_divisor_leq(n, cap):
    cap = max(1, min(n, cap))
    for d in range(cap, 0, -1):
        if n % d == 0:
            return d
    return 1


def _choose_blocks(B, C, S_pad, itemsize, target_bytes=2 * 1024 * 1024):
    """Pick (Bt, Ct, C_pad) so each input block moves ~0.5-2 MiB and fits the
    smallest scoped-VMEM budget (v5e 16 MiB) with double buffering."""
    plane_bytes = C * S_pad * itemsize
    if plane_bytes <= target_bytes:
        # Small/medium planes: fold batches into one block, but keep >= 2 grid
        # steps on the parallel (batch) axis when B allows it (v7x dual-TC).
        max_bt = max(1, target_bytes // plane_bytes)
        if B >= 2:
            max_bt = min(max_bt, B // 2)
        bt = _largest_divisor_leq(B, max_bt)
        return bt, C, C
    # Large planes: one batch per step, tile the channel axis in multiples of
    # 8 (keeps blocks (8,128)-aligned); pad C up to a multiple of the tile
    # (zero channels contribute nothing to the sums).
    row_bytes = S_pad * itemsize
    ct = max(8, (target_bytes // row_bytes) // 8 * 8)
    ct = min(ct, -(-C // 8) * 8)
    c_pad = -(-C // ct) * ct
    # TODO(synk): if even a single 8-channel row of S exceeds the budget
    # (extremely large H*W), additionally tile the spatial axis with a
    # two-pass partial-sum / normalize scheme.
    return 1, ct, c_pad


@jax.jit
def spatial_attn(x):
    """Pallas SpatialAttn forward. x: [B, C, H, W] -> [B, 1, H, W]."""
    B, C, H, W = x.shape
    S = H * W
    itemsize = x.dtype.itemsize

    # Lane-dense output: pad the flattened spatial axis to a multiple of 128.
    # Zero padding is safe: padded positions/channels contribute 0 to all sums.
    S_pad = max(128, -(-S // 128) * 128)

    Bt, Ct, C_pad = _choose_blocks(B, C, S_pad, itemsize)

    xs = x.reshape(B, C, S)
    if S_pad != S:
        xs = jnp.pad(xs, ((0, 0), (0, 0), (0, S_pad - S)))
    if C_pad != C:
        xs = jnp.pad(xs, ((0, 0), (0, C_pad - C), (0, 0)))

    grid = (B // Bt, C_pad // Ct)

    cost = pl.CostEstimate(
        flops=int(B * C_pad * S_pad + 2 * B * S_pad),
        transcendentals=int(B),
        bytes_accessed=int(B * C_pad * S_pad * itemsize + B * S_pad * itemsize),
    )

    out = pl.pallas_call(
        _spatial_attn_kernel,
        out_shape=jax.ShapeDtypeStruct((B, 1, S_pad), x.dtype),
        grid=grid,
        in_specs=[pl.BlockSpec((Bt, Ct, S_pad), lambda b, k: (b, k, 0))],
        out_specs=pl.BlockSpec((Bt, 1, S_pad), lambda b, k: (b, 0, 0)),
        scratch_shapes=[pltpu.VMEM((Bt, 1, S_pad), jnp.float32)],
        compiler_params=pltpu.CompilerParams(
            dimension_semantics=("parallel", "arbitrary")),
        cost_estimate=cost,
    )(xs)

    return out[:, :, :S].reshape(B, 1, H, W)


def _spatial_attn_ref(x):
    m = jnp.mean(x.astype(jnp.float32), axis=1, keepdims=True)
    return (m / jnp.sum(m, axis=(2, 3), keepdims=True)).astype(x.dtype)


if __name__ == "__main__":
    B, C, H, W = 2, 4, 16, 16
    key = jax.random.PRNGKey(0)
    # Positive inputs keep the per-batch denominator well-conditioned.
    x = jax.random.uniform(key, (B, C, H, W), jnp.float32,
                           minval=0.1, maxval=1.0)

    z = spatial_attn(x)
    z = jax.block_until_ready(z)

    assert z.shape == (B, 1, H, W)
    assert bool(jnp.all(jnp.isfinite(z)))

    # Check against a pure-JAX reference of the PyTorch module.
    z_ref = _spatial_attn_ref(x)
    assert bool(jnp.allclose(z, z_ref, rtol=1e-5, atol=1e-6)), (
        "max abs err", float(jnp.max(jnp.abs(z - z_ref))))
    # Each normalized attention map sums to 1.
    assert bool(jnp.allclose(jnp.sum(z.reshape(B, -1), axis=1),
                             jnp.ones((B,), jnp.float32),
                             rtol=1e-5, atol=1e-5))

    print("KERNEL_OK")
</pallas_src>

<mosaic_0001>
module attributes {stable_mosaic.version = 11 : i64} {
  func.func @_spatial_attn_kernel(%arg0: i32, %arg1: i32, %arg2: memref<1x4x256xf32, #tpu.memory_space<vmem>>, %arg3: memref<1x1x256xf32, #tpu.memory_space<vmem>>, %arg4: memref<1x1x256xf32, #tpu.memory_space<vmem>>) attributes {dimension_semantics = [#tpu.dimension_semantics<parallel>, #tpu.dimension_semantics<arbitrary>], iteration_bounds = array<i64: 2, 1>, scalar_prefetch = 0 : i64, scratch_operands = 1 : i64, tpu.core_type = #tpu.core_type<tc>, window_params = [{transform_indices = @transform_0, window_bounds = array<i64: 1, 4, 256>}, {transform_indices = @transform_1, window_bounds = array<i64: 1, 1, 256>}]} {
    %c0_i32 = arith.constant 0 : i32
    %0 = arith.cmpi eq, %arg1, %c0_i32 : i32
    %1 = arith.extui %0 : i1 to i32
    %c0_i32_0 = arith.constant 0 : i32
    %2 = arith.cmpi ne, %1, %c0_i32_0 : i32
    scf.if %2 {
      %cst_11 = arith.constant 0.000000e+00 : f32
      %12 = vector.broadcast %cst_11 : f32 to vector<1x1x256xf32>
      %c0_12 = arith.constant 0 : index
      %c0_13 = arith.constant 0 : index
      %c0_14 = arith.constant 0 : index
      %13 = vector.load %arg4[%c0_12, %c0_13, %c0_14] : memref<1x1x256xf32, #tpu.memory_space<vmem>>, vector<1x1x256xf32>
      tpu.vector_store %arg4[%c0_12, %c0_13, %c0_14], %12 {strides = array<i32>} : memref<1x1x256xf32, #tpu.memory_space<vmem>>, vector<1x1x256xf32>,
    } else {
    }
    %c0 = arith.constant 0 : index
    %c0_1 = arith.constant 0 : index
    %c0_2 = arith.constant 0 : index
    %3 = vector.load %arg2[%c0, %c0_1, %c0_2] : memref<1x4x256xf32, #tpu.memory_space<vmem>>, vector<1x4x256xf32>
    %c0_3 = arith.constant 0 : index
    %c0_4 = arith.constant 0 : index
    %c0_5 = arith.constant 0 : index
    %4 = vector.load %arg4[%c0_3, %c0_4, %c0_5] : memref<1x1x256xf32, #tpu.memory_space<vmem>>, vector<1x1x256xf32>
    %cst = arith.constant dense<0.000000e+00> : vector<1x256xf32>
    %5 = vector.multi_reduction <add>, %3, %cst [1] : vector<1x4x256xf32> to vector<1x256xf32>
    %6 = vector.shape_cast %5 : vector<1x256xf32> to vector<1x1x256xf32>
    %7 = arith.addf %4, %6 : vector<1x1x256xf32>
    %c0_6 = arith.constant 0 : index
    %c0_7 = arith.constant 0 : index
    %c0_8 = arith.constant 0 : index
    %8 = vector.load %arg4[%c0_6, %c0_7, %c0_8] : memref<1x1x256xf32, #tpu.memory_space<vmem>>, vector<1x1x256xf32>
    tpu.vector_store %arg4[%c0_6, %c0_7, %c0_8], %7 {strides = array<i32>} : memref<1x1x256xf32, #tpu.memory_space<vmem>>, vector<1x1x256xf32>,
    %c0_i32_9 = arith.constant 0 : i32
    %9 = arith.cmpi eq, %arg1, %c0_i32_9 : i32
    %10 = arith.extui %9 : i1 to i32
    %c0_i32_10 = arith.constant 0 : i32
    %11 = arith.cmpi ne, %10, %c0_i32_10 : i32
    scf.if %11 {
      %c0_11 = arith.constant 0 : index
      %c0_12 = arith.constant 0 : index
      %c0_13 = arith.constant 0 : index
      %12 = vector.load %arg4[%c0_11, %c0_12, %c0_13] : memref<1x1x256xf32, #tpu.memory_space<vmem>>, vector<1x1x256xf32>
      %cst_14 = arith.constant dense<0.000000e+00> : vector<1x1xf32>
      %13 = vector.multi_reduction <add>, %12, %cst_14 [2] : vector<1x1x256xf32> to vector<1x1xf32>
      %14 = vector.shape_cast %13 : vector<1x1xf32> to vector<1x1x1xf32>
      %15 = tpu.reciprocal %14 : vector<1x1x1xf32> -> vector<1x1x1xf32>
      %16 = vector.broadcast %15 : vector<1x1x1xf32> to vector<1x1x256xf32>
      %17 = arith.mulf %12, %16 : vector<1x1x256xf32>
      %c0_15 = arith.constant 0 : index
      %c0_16 = arith.constant 0 : index
      %c0_17 = arith.constant 0 : index
      %18 = vector.load %arg3[%c0_15, %c0_16, %c0_17] : memref<1x1x256xf32, #tpu.memory_space<vmem>>, vector<1x1x256xf32>
      tpu.vector_store %arg3[%c0_15, %c0_16, %c0_17], %17 {strides = array<i32>} : memref<1x1x256xf32, #tpu.memory_space<vmem>>, vector<1x1x256xf32>,
    } else {
    }
    return
  }
  func.func @transform_0(%arg0: i32, %arg1: i32) -> (i32, i32, i32) {
    %c0_i32 = arith.constant 0 : i32
    %c0_i32_0 = arith.constant 0 : i32
    return %arg0, %arg1, %c0_i32 : i32, i32, i32
  }
  func.func @transform_1(%arg0: i32, %arg1: i32) -> (i32, i32, i32) {
    %c0_i32 = arith.constant 0 : i32
    %c0_i32_0 = arith.constant 0 : i32
    %c0_i32_1 = arith.constant 0 : i32
    return %arg0, %c0_i32, %c0_i32_0 : i32, i32, i32
  }
}

</mosaic_0001>

<llo_original>
// kernel: spatial_attn.1
$region0: #{spatial_attn.1}
  #allocation0 [shape = 'u32[]', space=smem, size = 0x4, offset = 0x4, fixed_abs, tag = 'smem constant byte address 0x4 - core index']
  #allocation1 [shape = 'u32[144,128]{1,0:T(1,128)}', space=vmem, size = 0x12000, scoped, tag = 'internal scratch']
  #allocation2 [shape = 'f32[1,1,256]{2,1,0:T(1,128)}', space=vmem, size = 0x400, scoped, tag = 'scratch operand']
  %s0 = inlined_call_operand.vmem [shape: f32[2,4,256], index: 0, kind: input, shape index: {}]
  %s1 = inlined_call_operand.vmem [shape: f32[2,1,256], index: 1, kind: output, shape index: {}]
  %s2 = sld [smem:[#allocation0]]
  $region45: #{spatial_attn.1} parent=0
    _
  %s4 = ssub.s32 1, %s2
  %s5 = scalar_select 0, %s4, %s2
  loop: start=0, step=1, limit=4
  $region2: #{spatial_attn.1} parent=0 // loop_pre_header
    _
  $region3: #{spatial_attn.1} parent=0 // loop_header
    %s7 = sphi 0, %s11
    %p8 = scmp.ge.s32.totalorder %s7, 4
    %s14 = sphi 0, %s26
    %s15 = sphi 0, %s22
    %s16 = sphi 0, %s14
    %s17 = sphi 0, %s15
    %s18 = sphi 0, %s16
    %s19 = sphi 0, %s17
    %s31 = sphi 0, %s33
    %s34 = sphi 0, %s31
    %s35 = sphi 0, %s34
    %s51 = sphi 0, %s35
    %s57 = sphi 0, %s59
    %s60 = sphi 0, %s57
    %s61 = sphi 0, %s60
    %s77 = sphi 0, %s61
  $region4: #{spatial_attn.1} parent=0 // loop_header_branch
    %10 = sbr.rel (%p8) target = $region8
  $region5: #{spatial_attn.1} parent=0 // loop_body
    %s12 = ssub.s32 %s7, 1
    %s13 = ssub.s32 %s7, 2
    %s20 = sadd.s32 1, %s15
    %p21 = scmp.ge.s32.totalorder %s20, 1
    %s22 = scalar_select %p21, 0, %s20
    %s23 = sadd.s32 1, %s14
    %s24 = scalar_select %p21, %s23, %s14
    %p25 = scmp.ge.s32.totalorder %s24, 2
    %s26 = scalar_select %p25, 0, %s24
    %s27 = ssub.s32 %s14, %s26
    %s28 = ssub.s32 %s15, %s22
    %s29 = sor.u32 %s27, %s28
    %p30 = scmp.eq.s32.totalorder %s29, 0
    %s32 = sadd.s32 %s31, 1
    %s33 = scalar_select %p30, %s31, %s32
    %p36 = pneg %p30
    %p37 = scmp.eq.s32.totalorder %s7, 1
    %p38 = por %p36, %p37
    %p39 = scmp.ne.s32.totalorder %s31, %s34
    %p40 = scmp.eq.s32.totalorder %s7, 0
    %p41 = por %p39, %p40
    %p42 = scmp.ne.s32.totalorder %s31, %s34
    %p43 = scmp.eq.s32.totalorder %s12, 1
    %p44 = por %p42, %p43
    %p45 = scmp.ne.s32.totalorder %s34, %s35
    %p46 = scmp.eq.s32.totalorder %s12, 0
    %p47 = por %p45, %p46
    %p48 = scmp.ne.s32.totalorder %s34, %s35
    %p49 = scmp.eq.s32.totalorder %s13, 1
    %p50 = por %p48, %p49
    %p52 = scmp.ne.s32.totalorder %s35, %s51
    %p53 = scmp.eq.s32.totalorder %s13, 0
    %p54 = por %p52, %p53
    %s55 = ssub.s32 %s14, %s26
    %p56 = scmp.eq.s32.totalorder %s55, 0
    %s58 = sadd.s32 %s57, 1
    %s59 = scalar_select %p56, %s57, %s58
    %p62 = pneg %p56
    %p63 = scmp.eq.s32.totalorder %s7, 1
    %p64 = por %p62, %p63
    %p65 = scmp.ne.s32.totalorder %s57, %s60
    %p66 = scmp.eq.s32.totalorder %s7, 0
    %p67 = por %p65, %p66
    %p68 = scmp.ne.s32.totalorder %s57, %s60
    %p69 = scmp.eq.s32.totalorder %s12, 1
    %p70 = por %p68, %p69
    %p71 = scmp.ne.s32.totalorder %s60, %s61
    %p72 = scmp.eq.s32.totalorder %s12, 0
    %p73 = por %p71, %p72
    %p74 = scmp.ne.s32.totalorder %s60, %s61
    %p75 = scmp.eq.s32.totalorder %s13, 1
    %p76 = por %p74, %p75
    %p78 = scmp.ne.s32.totalorder %s61, %s77
    %p79 = scmp.eq.s32.totalorder %s13, 0
    %p80 = por %p78, %p79
    %p81 = scmp.le.s32.totalorder 1, %s7
    %p82 = scmp.lt.s32.totalorder %s7, 3
    %p83 = pnand %p81, %p82
    %p84 = pneg %p83
    // Predicated region
    $region9: #{spatial_attn.1} parent=5 // pred_check
      _
    $region10: #{spatial_attn.1} parent=5 // pred_check_branch
      %86 = sbr.rel (%p83) target = $region12
    $region11: #{spatial_attn.1} parent=5 // pred_region
      %s87 = ssub.s32 %s7, 1
    $region12: #{spatial_attn.1} parent=5 // pred_fallthru
      _
    %p88 = scmp.lt.s32.totalorder %s7, 2
    // Predicated region
    $region13: #{spatial_attn.1} parent=5 // pred_check
      %p89 = pneg %p88
    $region14: #{spatial_attn.1} parent=5 // pred_check_branch
      %91 = sbr.rel (%p89) target = $region16
    $region15: #{spatial_attn.1} parent=5 // pred_region
      // Predicated region
      $region17: #{spatial_attn.1} parent=15 // pred_check
        %p92 = pneg %p41
      $region18: #{spatial_attn.1} parent=15 // pred_check_branch
        %94 = sbr.rel (%p92) target = $region20
      $region19: #{spatial_attn.1} parent=15 // pred_region
        %p95 = scmp.lt.s32.totalorder %s14, 1
        %s96 = scalar_select %p95, %s14, 1
        %p97 = scmp.lt.s32.totalorder %s15, 0
        %s98 = scalar_select %p97, %s15, 0
        %s99 = smul.addr %s98, 2
        %s100 = smul.addr %s96, 2
        %s101 = sadd.s32 %s99, %s100
        %s102 = smul.addr %s101, 4
        %s103 = scalar_lea.vmem %s0, %s102
      $region20: #{spatial_attn.1} parent=15 // pred_fallthru
        _
    $region16: #{spatial_attn.1} parent=5 // pred_fallthru
      _
    %p104 = scmp.le.s32.totalorder 1, %s7
    %p105 = scmp.lt.s32.totalorder %s7, 3
    %p106 = pnand %p104, %p105
    %p107 = pneg %p106
    // Predicated region
    $region21: #{spatial_attn.1} parent=5 // pred_check
      _
    $region22: #{spatial_attn.1} parent=5 // pred_check_branch
      %109 = sbr.rel (%p106) target = $region24
    $region23: #{spatial_attn.1} parent=5 // pred_region
      %s110 = ssub.s32 %s7, 1
      %p111 = scmp.lt.s32.totalorder %s16, 1
      %s112 = scalar_select %p111, %s16, 1
      %p113 = scmp.lt.s32.totalorder %s17, 0
      %s114 = scalar_select %p113, %s17, 0
      %s115 = smul.addr %s114, 2
      %s116 = smul.addr %s112, 2
      %s117 = sadd.s32 %s115, %s116
      %s118 = smul.addr %s117, 4
      %s119 = scalar_lea.vmem %s0, %s118
      %p120 = pneg %p47
      %p121 = pneg %p44
      %p122 = pneg %p73
      %p123 = pneg %p70
      %p124 = scmp.lt.s32.totalorder %s16, 1
      %s125 = scalar_select %p124, %s16, 1
      %s126 = smul.addr %s125, 2
      %s127 = scalar_lea.vmem %s1, %s126
      %p128 = scmp.lt.s32.totalorder %s16, 1
      %s129 = scalar_select %p128, %s16, 1
      %p130 = scmp.lt.s32.totalorder %s17, 0
      %s131 = scalar_select %p130, %s17, 0
      %s132 = smul.addr %s131, 2
      %s133 = smul.addr %s129, 2
      %s134 = sadd.s32 %s132, %s133
      %s135 = smul.addr %s134, 4
      %s136 = scalar_lea.vmem %s0, %s135
      %p137 = scmp.lt.s32.totalorder %s16, 1
      %s138 = scalar_select %p137, %s16, 1
      %s139 = smul.addr %s138, 2
      %s140 = scalar_lea.vmem %s1, %s139
      %p141 = scmp.eq.s32.totalorder %s17, 0
      // Predicated region
      $region25: #{spatial_attn.1} parent=23 // pred_check
        %p142 = pneg %p141
      $region26: #{spatial_attn.1} parent=23 // pred_check_branch
        %144 = sbr.rel (%p142) target = $region28
      $region27: #{spatial_attn.1} parent=23 // pred_region
        %v145 = vlaneseq
        %vm146 = vcmp.ge.s32.totalorder %v145, 0
        %vm147 = vcmp.lt.s32.totalorder %v145, 256
        %vm148 = vmand %vm146, %vm147
        %149 = vst.msk [vmem:[#allocation2] sm:$0x3] %vm148, 0.0
      $region28: #{spatial_attn.1} parent=23 // pred_fallthru
        _
      %v150 = vld [vmem:[%s136] sm:$0xff]
      %v151 = vld [vmem:[#allocation2] sm:$0x3]
      %v153 = vcombine.high %v150, %v150
      %vm155 = vcmask 1043456
      %v156 = vsel %vm155, %v150, 0.0
      %v157 = vrot.slane %v156, 4
      %v158 = vadd.f32 %v156, %v157
      %v159 = vrot.slane %v158, 2
      %v160 = vadd.f32 %v158, %v159
      %v161 = vrot.slane %v160, 1
      %v162 = vadd.f32 %v160, %v161
      %v163 = vsel %vm155, %v153, 0.0
      %v164 = vrot.slane %v163, 4
      %v165 = vadd.f32 %v163, %v164
      %v166 = vrot.slane %v165, 2
      %v167 = vadd.f32 %v165, %v166
      %v168 = vrot.slane %v167, 1
      %v169 = vadd.f32 %v167, %v168
      %v172 = vcombine.low %v162, %v169
      %v174 = vunpack.c.l.s4 1966171168
      %v175 = vunpack.c.0.s8 %v174
      %v176 = vlaneseq
      %v177 = vshrl.u32 %v176, 7
      %v178 = vsub.s32 %v175, %v177
      %v179 = vrot.slane %v172, %v178
      %v181 = vunpack.c.l.s4 1966171168
      %v182 = vunpack.c.0.s8 %v181
      %v183 = vlaneseq
      %v184 = vshrl.u32 %v183, 7
      %v185 = vsub.s32 %v182, %v184
      %v186 = vrot.slane %v179, %v185
      %v188 = vadd.f32 %v151, %v186
      %v189 = vlaneseq
      %vm190 = vcmp.ge.s32.totalorder %v189, 0
      %vm191 = vcmp.lt.s32.totalorder %v189, 256
      %vm192 = vmand %vm190, %vm191
      %193 = vst.msk [vmem:[#allocation2] sm:$0x3] %vm192, %v188
      // Predicated region
      $region29: #{spatial_attn.1} parent=23 // pred_check
        %p194 = pneg %p141
      $region30: #{spatial_attn.1} parent=23 // pred_check_branch
        %196 = sbr.rel (%p194) target = $region32
      $region31: #{spatial_attn.1} parent=23 // pred_region
        %v197 = vld [vmem:[#allocation2] sm:$0x3]
        %v199 = vlaneseq
        %v200 = vshrl.u32 %v199, 7
        %v201 = vsub.s32 0, %v200
        %v202 = vrot.slane %v197, %v201
        %v203 = vlaneseq
        %v204 = vshrl.u32 %v203, 7
        %v205 = vsub.s32 1, %v204
        %v206 = vrot.slane %v197, %v205
        %vm209 = vcmask 1040384
        %v210 = vsel %vm209, %v202, 0.0
        %v211 = vsel %vm209, %v206, 0.0
        %v212 = vadd.f32 %v210, %v211
        %213 = vadd.xlane.f32.xlu0 %v212
        %v214 = vpop.xlane.xlu0 %213
        %v215 = vrcp.pop %v214
        %v217 = vlaneseq
        %v218 = vshrl.u32 %v217, 7
        %v219 = vsub.s32 0, %v218
        %v220 = vrot.slane %v215, %v219
        %v222 = vmul.f32 %v197, %v220
        %223 = vst.msk [vmem:[%s140] sm:$0x3] %vm192, %v222
      $region32: #{spatial_attn.1} parent=23 // pred_fallthru
        _
      %p224 = scmp.lt.s32.totalorder %s16, 1
      %s225 = scalar_select %p224, %s16, 1
      %s226 = smul.addr %s225, 2
      %s227 = scalar_lea.vmem %s1, %s226
      // Predicated region
      $region33: #{spatial_attn.1} parent=23 // pred_check
        %p228 = pneg %p70
      $region34: #{spatial_attn.1} parent=23 // pred_check_branch
        %230 = sbr.rel (%p228) target = $region36
      $region35: #{spatial_attn.1} parent=23 // pred_region
        _
      $region36: #{spatial_attn.1} parent=23 // pred_fallthru
        _
    $region24: #{spatial_attn.1} parent=5 // pred_fallthru
      _
    %p231 = scmp.le.s32.totalorder 2, %s7
    // Predicated region
    $region37: #{spatial_attn.1} parent=5 // pred_check
      %p232 = pneg %p231
    $region38: #{spatial_attn.1} parent=5 // pred_check_branch
      %234 = sbr.rel (%p232) target = $region40
    $region39: #{spatial_attn.1} parent=5 // pred_region
      %s235 = ssub.s32 %s7, 2
      // Predicated region
      $region41: #{spatial_attn.1} parent=39 // pred_check
        %p236 = pneg %p76
      $region42: #{spatial_attn.1} parent=39 // pred_check_branch
        %238 = sbr.rel (%p236) target = $region44
      $region43: #{spatial_attn.1} parent=39 // pred_region
        %p239 = scmp.lt.s32.totalorder %s18, 1
        %s240 = scalar_select %p239, %s18, 1
        %s241 = smul.addr %s240, 2
        %s242 = scalar_lea.vmem %s1, %s241
      $region44: #{spatial_attn.1} parent=39 // pred_fallthru
        _
    $region40: #{spatial_attn.1} parent=5 // pred_fallthru
      _
  $region6: #{spatial_attn.1} parent=0 // loop_footer
    %s11 = sadd.s32 1, %s7
  $region7: #{spatial_attn.1} parent=0 // loop_footer_branch
    %6 = sbr.rel target = $region3
  $region8: #{spatial_attn.1} parent=0 // loop_exit
    _

</llo_original>
